<compile_context>
chip_gen: v7x
topology: tpu7x:2x2x1
jax: 0.10.0
libtpu: 0.0.40
codegen_flags: <defaults>
</compile_context>

<pallas_src>
import jax
import jax.numpy as jnp
from jax.experimental import pallas as pl
from jax.experimental.pallas import tpu as pltpu

LN_EPS = 1e-5


def _round_up(x, m):
    return ((x + m - 1) // m) * m


def _transition_kernel(state_ref, act_ref,
                       w1s_ref, w1a_ref, b1_ref,
                       w2_ref, b2_ref,
                       g_ref, beta_ref,
                       w3_ref, b3_ref,
                       o_ref):
    st = state_ref[...]                          # [TB, S]  f32
    act = act_ref[...]                           # [TB, 1]  int32
    tb = st.shape[0]
    a_pad = w1a_ref.shape[0]

    # Fused one-hot encoding of the action (replaces one_hot + concat glue).
    iota = jax.lax.broadcasted_iota(jnp.int32, (tb, a_pad), 1)
    one_hot = (iota == act).astype(jnp.bfloat16)  # [TB, A_pad]

    # Linear(S+A -> H): state-row block + action-row block, f32 accumulate.
    h1 = jnp.dot(st.astype(jnp.bfloat16), w1s_ref[...],
                 preferred_element_type=jnp.float32)
    h1 = h1 + jnp.dot(one_hot, w1a_ref[...],
                      preferred_element_type=jnp.float32)
    h1 = h1 + b1_ref[...]
    h1 = jnp.maximum(h1, 0.0)

    # Linear(H -> H)
    h2 = jnp.dot(h1.astype(jnp.bfloat16), w2_ref[...],
                 preferred_element_type=jnp.float32) + b2_ref[...]

    # LayerNorm over last dim (biased variance, eps=1e-5), affine — all f32.
    mean = jnp.mean(h2, axis=-1, keepdims=True)
    centered = h2 - mean
    var = jnp.mean(centered * centered, axis=-1, keepdims=True)
    ln = centered * jax.lax.rsqrt(var + LN_EPS)
    ln = ln * g_ref[...] + beta_ref[...]

    # ReLU
    h3 = jnp.maximum(ln, 0.0)

    # Linear(H -> S_pad): lane-dense (padded to multiple of 128) output.
    out = jnp.dot(h3.astype(jnp.bfloat16), w3_ref[...],
                  preferred_element_type=jnp.float32) + b3_ref[...]
    o_ref[...] = out.astype(o_ref.dtype)


def transition_forward(state, action, params, *, block_b=512):
    """state: [B, S] float32, action: [B] (any numeric dtype; valid ids in [0, A)).

    NOTE: like the PyTorch module, `action` is truncated to int; negative or
    out-of-range actions are caller error (torch's one_hot would raise).
    """
    B, S = state.shape
    w1s, w1a, b1, w2, b2, gamma, beta, w3, b3 = params
    H = w1s.shape[1]
    A_pad = w1a.shape[0]
    S_pad = w3.shape[1]

    act = action.astype(jnp.int32).reshape(B, 1)

    # Sublane-aligned batch tile: full (rounded-up) batch if small, otherwise
    # a multiple-of-8 tile of at most `block_b` rows.
    TB = min(_round_up(B, 8), max(8, (block_b // 8) * 8))
    Bp = _round_up(B, TB)
    if Bp != B:
        state = jnp.pad(state, ((0, Bp - B), (0, 0)))
        act = jnp.pad(act, ((0, Bp - B), (0, 0)))

    grid = (Bp // TB,)
    tiled = lambda shape: pl.BlockSpec(shape, lambda i: (i, 0))      # batch-tiled
    resident = lambda shape: pl.BlockSpec(shape, lambda i: (0, 0))   # stays in VMEM

    out = pl.pallas_call(
        _transition_kernel,
        out_shape=jax.ShapeDtypeStruct((Bp, S_pad), jnp.float32),
        grid=grid,
        in_specs=[
            tiled((TB, S)),            # state
            tiled((TB, 1)),            # action ids
            resident((S, H)),          # W1 (state rows), bf16
            resident((A_pad, H)),      # W1 (action rows), bf16
            resident((1, H)),          # b1
            resident((H, H)),          # W2, bf16
            resident((1, H)),          # b2
            resident((1, H)),          # LN gamma
            resident((1, H)),          # LN beta
            resident((H, S_pad)),      # W3 (lane-padded), bf16
            resident((1, S_pad)),      # b3 (lane-padded)
        ],
        out_specs=tiled((TB, S_pad)),
        compiler_params=pltpu.CompilerParams(
            dimension_semantics=("parallel",),   # megacore-shard batch on v7x
        ),
    )(state, act, w1s, w1a, b1, w2, b2, gamma, beta, w3, b3)

    return out[:B, :S]


def init_params(key, state_dim, action_dim, hidden_dim):
    """Synthetic parameters (shapes match nn.Linear / nn.LayerNorm).

    Weights are stored transposed to [in, out]; W1 is pre-split into its
    state / action row blocks (action rows sublane-padded to 8); W3/b3 are
    lane-padded to a multiple of 128 output columns (zeros). MXU-facing
    weights are bf16, biases / LN params are f32.
    """
    k1, k2, k3, k4, k5, k6 = jax.random.split(key, 6)
    in0 = state_dim + action_dim
    a_pad = _round_up(action_dim, 8)
    s_pad = _round_up(state_dim, 128)

    w1 = jax.random.normal(k1, (in0, hidden_dim), jnp.float32) / jnp.sqrt(in0)
    w1_state = w1[:state_dim].astype(jnp.bfloat16)
    w1_action = jnp.zeros((a_pad, hidden_dim), jnp.float32)
    w1_action = w1_action.at[:action_dim].set(w1[state_dim:]).astype(jnp.bfloat16)
    b1 = jax.random.normal(k2, (1, hidden_dim), jnp.float32) * 0.01

    w2 = (jax.random.normal(k3, (hidden_dim, hidden_dim), jnp.float32)
          / jnp.sqrt(hidden_dim)).astype(jnp.bfloat16)
    b2 = jax.random.normal(k4, (1, hidden_dim), jnp.float32) * 0.01

    gamma = jnp.ones((1, hidden_dim), jnp.float32)
    beta = jnp.zeros((1, hidden_dim), jnp.float32)

    w3 = jax.random.normal(k5, (hidden_dim, state_dim), jnp.float32) / jnp.sqrt(hidden_dim)
    w3_p = jnp.zeros((hidden_dim, s_pad), jnp.float32)
    w3_p = w3_p.at[:, :state_dim].set(w3).astype(jnp.bfloat16)
    b3 = jax.random.normal(k6, (1, state_dim), jnp.float32) * 0.01
    b3_p = jnp.zeros((1, s_pad), jnp.float32).at[:, :state_dim].set(b3)

    return (w1_state, w1_action, b1, w2, b2, gamma, beta, w3_p, b3_p)


def _reference_forward(state, action, params, state_dim):
    """Pure-JAX reference with the same bf16-operand / f32-accumulate numerics."""
    w1s, w1a, b1, w2, b2, gamma, beta, w3, b3 = params
    a_pad = w1a.shape[0]
    one_hot = jax.nn.one_hot(action.astype(jnp.int32), a_pad, dtype=jnp.bfloat16)
    h1 = jnp.dot(state.astype(jnp.bfloat16), w1s, preferred_element_type=jnp.float32)
    h1 = h1 + jnp.dot(one_hot, w1a, preferred_element_type=jnp.float32) + b1
    h1 = jnp.maximum(h1, 0.0)
    h2 = jnp.dot(h1.astype(jnp.bfloat16), w2, preferred_element_type=jnp.float32) + b2
    mean = jnp.mean(h2, axis=-1, keepdims=True)
    var = jnp.mean((h2 - mean) ** 2, axis=-1, keepdims=True)
    ln = (h2 - mean) * jax.lax.rsqrt(var + LN_EPS) * gamma + beta
    h3 = jnp.maximum(ln, 0.0)
    out = jnp.dot(h3.astype(jnp.bfloat16), w3, preferred_element_type=jnp.float32) + b3
    return out[:, :state_dim]


if __name__ == "__main__":
    # Shapes consistent with the module: state_dim=32, action_dim=4 (maze:
    # up/down/left/right), hidden_dim=32.
    B, S, A, H = 8, 32, 4, 32

    key = jax.random.PRNGKey(0)
    k_state, k_action, k_params, k_state2, k_action2 = jax.random.split(key, 5)
    params = init_params(k_params, S, A, H)

    state = jax.random.normal(k_state, (B, S), jnp.float32)
    action = jax.random.randint(k_action, (B,), 0, A).astype(jnp.float32)

    out = jax.block_until_ready(transition_forward(state, action, params))
    ref = _reference_forward(state, action, params, S)
    assert out.shape == (B, S)
    assert jnp.allclose(out, ref, atol=1e-2, rtol=1e-2), "mismatch vs reference"

    # Second config exercises the multi-step batch grid + row-padding path.
    B2 = 20
    state2 = jax.random.normal(k_state2, (B2, S), jnp.float32)
    action2 = jax.random.randint(k_action2, (B2,), 0, A).astype(jnp.float32)
    out2 = jax.block_until_ready(transition_forward(state2, action2, params, block_b=16))
    ref2 = _reference_forward(state2, action2, params, S)
    assert out2.shape == (B2, S)
    assert jnp.allclose(out2, ref2, atol=1e-2, rtol=1e-2), "mismatch vs reference (tiled)"

    print("KERNEL_OK")
</pallas_src>

<mosaic_0001>
module attributes {stable_mosaic.version = 11 : i64} {
  func.func @_transition_kernel(%arg0: i32, %arg1: memref<8x32xf32, #tpu.memory_space<vmem>>, %arg2: memref<8x1xi32, #tpu.memory_space<vmem>>, %arg3: memref<32x32xbf16, #tpu.memory_space<vmem>>, %arg4: memref<8x32xbf16, #tpu.memory_space<vmem>>, %arg5: memref<1x32xf32, #tpu.memory_space<vmem>>, %arg6: memref<32x32xbf16, #tpu.memory_space<vmem>>, %arg7: memref<1x32xf32, #tpu.memory_space<vmem>>, %arg8: memref<1x32xf32, #tpu.memory_space<vmem>>, %arg9: memref<1x32xf32, #tpu.memory_space<vmem>>, %arg10: memref<32x128xbf16, #tpu.memory_space<vmem>>, %arg11: memref<1x128xf32, #tpu.memory_space<vmem>>, %arg12: memref<8x128xf32, #tpu.memory_space<vmem>>) attributes {dimension_semantics = [#tpu.dimension_semantics<parallel>], iteration_bounds = array<i64: 1>, scalar_prefetch = 0 : i64, scratch_operands = 0 : i64, tpu.core_type = #tpu.core_type<tc>, window_params = [{transform_indices = @transform_0, window_bounds = array<i64: 8, 32>}, {transform_indices = @transform_1, window_bounds = array<i64: 8, 1>}, {pipeline_mode = #tpu.pipeline_mode<synchronous>, transform_indices = @transform_2, window_bounds = array<i64: 32, 32>}, {pipeline_mode = #tpu.pipeline_mode<synchronous>, transform_indices = @transform_3, window_bounds = array<i64: 8, 32>}, {pipeline_mode = #tpu.pipeline_mode<synchronous>, transform_indices = @transform_4, window_bounds = array<i64: 1, 32>}, {pipeline_mode = #tpu.pipeline_mode<synchronous>, transform_indices = @transform_5, window_bounds = array<i64: 32, 32>}, {pipeline_mode = #tpu.pipeline_mode<synchronous>, transform_indices = @transform_6, window_bounds = array<i64: 1, 32>}, {pipeline_mode = #tpu.pipeline_mode<synchronous>, transform_indices = @transform_7, window_bounds = array<i64: 1, 32>}, {pipeline_mode = #tpu.pipeline_mode<synchronous>, transform_indices = @transform_8, window_bounds = array<i64: 1, 32>}, {pipeline_mode = #tpu.pipeline_mode<synchronous>, transform_indices = @transform_9, window_bounds = array<i64: 32, 128>}, {pipeline_mode = #tpu.pipeline_mode<synchronous>, transform_indices = @transform_10, window_bounds = array<i64: 1, 128>}, {transform_indices = @transform_11, window_bounds = array<i64: 8, 128>}]} {
    %c0 = arith.constant 0 : index
    %c0_0 = arith.constant 0 : index
    %0 = vector.load %arg1[%c0, %c0_0] : memref<8x32xf32, #tpu.memory_space<vmem>>, vector<8x32xf32>
    %c0_1 = arith.constant 0 : index
    %c0_2 = arith.constant 0 : index
    %1 = vector.load %arg2[%c0_1, %c0_2] : memref<8x1xi32, #tpu.memory_space<vmem>>, vector<8x1xi32>
    %2 = tpu.iota {dimensions = array<i32: 1>} : vector<8x8xi32>
    %3 = vector.broadcast %1 : vector<8x1xi32> to vector<8x8xi32>
    %4 = arith.cmpi eq, %2, %3 : vector<8x8xi32>
    %5 = arith.extui %4 : vector<8x8xi1> to vector<8x8xi32>
    %6 = arith.sitofp %5 : vector<8x8xi32> to vector<8x8xf32>
    %7 = arith.truncf %6 : vector<8x8xf32> to vector<8x8xbf16>
    %8 = arith.truncf %0 : vector<8x32xf32> to vector<8x32xbf16>
    %c0_3 = arith.constant 0 : index
    %c0_4 = arith.constant 0 : index
    %9 = vector.load %arg3[%c0_3, %c0_4] : memref<32x32xbf16, #tpu.memory_space<vmem>>, vector<32x32xbf16>
    %cst = arith.constant dense<0.000000e+00> : vector<8x32xf32>
    %10 = tpu.matmul %8, %9, %cst {dimension_numbers = #tpu.dot_dimension_numbers<[1], [0], [0], [1], [0, 0, 1, 1], [], []>} : vector<8x32xbf16>, vector<32x32xbf16>, vector<8x32xf32> -> vector<8x32xf32>
    %c0_5 = arith.constant 0 : index
    %c0_6 = arith.constant 0 : index
    %11 = vector.load %arg4[%c0_5, %c0_6] : memref<8x32xbf16, #tpu.memory_space<vmem>>, vector<8x32xbf16>
    %cst_7 = arith.constant dense<0.000000e+00> : vector<8x32xf32>
    %12 = tpu.matmul %7, %11, %cst_7 {dimension_numbers = #tpu.dot_dimension_numbers<[1], [0], [0], [1], [0, 0, 1, 1], [], []>} : vector<8x8xbf16>, vector<8x32xbf16>, vector<8x32xf32> -> vector<8x32xf32>
    %13 = arith.addf %10, %12 : vector<8x32xf32>
    %c0_8 = arith.constant 0 : index
    %c0_9 = arith.constant 0 : index
    %14 = vector.load %arg5[%c0_8, %c0_9] : memref<1x32xf32, #tpu.memory_space<vmem>>, vector<1x32xf32>
    %15 = vector.broadcast %14 : vector<1x32xf32> to vector<8x32xf32>
    %16 = arith.addf %13, %15 : vector<8x32xf32>
    %cst_10 = arith.constant 0.000000e+00 : f32
    %17 = vector.broadcast %cst_10 : f32 to vector<8x32xf32>
    %18 = arith.maximumf %16, %17 : vector<8x32xf32>
    %19 = arith.truncf %18 : vector<8x32xf32> to vector<8x32xbf16>
    %c0_11 = arith.constant 0 : index
    %c0_12 = arith.constant 0 : index
    %20 = vector.load %arg6[%c0_11, %c0_12] : memref<32x32xbf16, #tpu.memory_space<vmem>>, vector<32x32xbf16>
    %cst_13 = arith.constant dense<0.000000e+00> : vector<8x32xf32>
    %21 = tpu.matmul %19, %20, %cst_13 {dimension_numbers = #tpu.dot_dimension_numbers<[1], [0], [0], [1], [0, 0, 1, 1], [], []>} : vector<8x32xbf16>, vector<32x32xbf16>, vector<8x32xf32> -> vector<8x32xf32>
    %c0_14 = arith.constant 0 : index
    %c0_15 = arith.constant 0 : index
    %22 = vector.load %arg7[%c0_14, %c0_15] : memref<1x32xf32, #tpu.memory_space<vmem>>, vector<1x32xf32>
    %23 = vector.broadcast %22 : vector<1x32xf32> to vector<8x32xf32>
    %24 = arith.addf %21, %23 : vector<8x32xf32>
    %cst_16 = arith.constant dense<0.000000e+00> : vector<8xf32>
    %25 = vector.multi_reduction <add>, %24, %cst_16 [1] : vector<8x32xf32> to vector<8xf32>
    %26 = vector.shape_cast %25 : vector<8xf32> to vector<8x1xf32>
    %cst_17 = arith.constant 3.200000e+01 : f32
    %27 = vector.broadcast %cst_17 : f32 to vector<8x1xf32>
    %28 = arith.divf %26, %27 : vector<8x1xf32>
    %29 = vector.broadcast %28 : vector<8x1xf32> to vector<8x32xf32>
    %30 = arith.subf %24, %29 : vector<8x32xf32>
    %31 = arith.mulf %30, %30 : vector<8x32xf32>
    %cst_18 = arith.constant dense<0.000000e+00> : vector<8xf32>
    %32 = vector.multi_reduction <add>, %31, %cst_18 [1] : vector<8x32xf32> to vector<8xf32>
    %33 = vector.shape_cast %32 : vector<8xf32> to vector<8x1xf32>
    %cst_19 = arith.constant 3.200000e+01 : f32
    %34 = vector.broadcast %cst_19 : f32 to vector<8x1xf32>
    %35 = arith.divf %33, %34 : vector<8x1xf32>
    %cst_20 = arith.constant 9.99999974E-6 : f32
    %36 = vector.broadcast %cst_20 : f32 to vector<8x1xf32>
    %37 = arith.addf %35, %36 : vector<8x1xf32>
    %38 = math.rsqrt %37 : vector<8x1xf32>
    %39 = vector.broadcast %38 : vector<8x1xf32> to vector<8x32xf32>
    %40 = arith.mulf %30, %39 : vector<8x32xf32>
    %c0_21 = arith.constant 0 : index
    %c0_22 = arith.constant 0 : index
    %41 = vector.load %arg8[%c0_21, %c0_22] : memref<1x32xf32, #tpu.memory_space<vmem>>, vector<1x32xf32>
    %42 = vector.broadcast %41 : vector<1x32xf32> to vector<8x32xf32>
    %43 = arith.mulf %40, %42 : vector<8x32xf32>
    %c0_23 = arith.constant 0 : index
    %c0_24 = arith.constant 0 : index
    %44 = vector.load %arg9[%c0_23, %c0_24] : memref<1x32xf32, #tpu.memory_space<vmem>>, vector<1x32xf32>
    %45 = vector.broadcast %44 : vector<1x32xf32> to vector<8x32xf32>
    %46 = arith.addf %43, %45 : vector<8x32xf32>
    %cst_25 = arith.constant 0.000000e+00 : f32
    %47 = vector.broadcast %cst_25 : f32 to vector<8x32xf32>
    %48 = arith.maximumf %46, %47 : vector<8x32xf32>
    %49 = arith.truncf %48 : vector<8x32xf32> to vector<8x32xbf16>
    %c0_26 = arith.constant 0 : index
    %c0_27 = arith.constant 0 : index
    %50 = vector.load %arg10[%c0_26, %c0_27] : memref<32x128xbf16, #tpu.memory_space<vmem>>, vector<32x128xbf16>
    %cst_28 = arith.constant dense<0.000000e+00> : vector<8x128xf32>
    %51 = tpu.matmul %49, %50, %cst_28 {dimension_numbers = #tpu.dot_dimension_numbers<[1], [0], [0], [1], [0, 0, 1, 1], [], []>} : vector<8x32xbf16>, vector<32x128xbf16>, vector<8x128xf32> -> vector<8x128xf32>
    %c0_29 = arith.constant 0 : index
    %c0_30 = arith.constant 0 : index
    %52 = vector.load %arg11[%c0_29, %c0_30] : memref<1x128xf32, #tpu.memory_space<vmem>>, vector<1x128xf32>
    %53 = vector.broadcast %52 : vector<1x128xf32> to vector<8x128xf32>
    %54 = arith.addf %51, %53 : vector<8x128xf32>
    %c0_31 = arith.constant 0 : index
    %c0_32 = arith.constant 0 : index
    %55 = vector.load %arg12[%c0_31, %c0_32] : memref<8x128xf32, #tpu.memory_space<vmem>>, vector<8x128xf32>
    tpu.vector_store %arg12[%c0_31, %c0_32], %54 {strides = array<i32>} : memref<8x128xf32, #tpu.memory_space<vmem>>, vector<8x128xf32>,
    return
  }
  func.func @transform_0(%arg0: i32) -> (i32, i32) {
    %c0_i32 = arith.constant 0 : i32
    %c0_i32_0 = arith.constant 0 : i32
    return %arg0, %c0_i32 : i32, i32
  }
  func.func @transform_1(%arg0: i32) -> (i32, i32) {
    %c0_i32 = arith.constant 0 : i32
    %c0_i32_0 = arith.constant 0 : i32
    return %arg0, %c0_i32 : i32, i32
  }
  func.func @transform_2(%arg0: i32) -> (i32, i32) {
    %c0_i32 = arith.constant 0 : i32
    %c0_i32_0 = arith.constant 0 : i32
    %c0_i32_1 = arith.constant 0 : i32
    return %c0_i32, %c0_i32_0 : i32, i32
  }
  func.func @transform_3(%arg0: i32) -> (i32, i32) {
    %c0_i32 = arith.constant 0 : i32
    %c0_i32_0 = arith.constant 0 : i32
    %c0_i32_1 = arith.constant 0 : i32
    return %c0_i32, %c0_i32_0 : i32, i32
  }
  func.func @transform_4(%arg0: i32) -> (i32, i32) {
    %c0_i32 = arith.constant 0 : i32
    %c0_i32_0 = arith.constant 0 : i32
    %c0_i32_1 = arith.constant 0 : i32
    return %c0_i32, %c0_i32_0 : i32, i32
  }
  func.func @transform_5(%arg0: i32) -> (i32, i32) {
    %c0_i32 = arith.constant 0 : i32
    %c0_i32_0 = arith.constant 0 : i32
    %c0_i32_1 = arith.constant 0 : i32
    return %c0_i32, %c0_i32_0 : i32, i32
  }
  func.func @transform_6(%arg0: i32) -> (i32, i32) {
    %c0_i32 = arith.constant 0 : i32
    %c0_i32_0 = arith.constant 0 : i32
    %c0_i32_1 = arith.constant 0 : i32
    return %c0_i32, %c0_i32_0 : i32, i32
  }
  func.func @transform_7(%arg0: i32) -> (i32, i32) {
    %c0_i32 = arith.constant 0 : i32
    %c0_i32_0 = arith.constant 0 : i32
    %c0_i32_1 = arith.constant 0 : i32
    return %c0_i32, %c0_i32_0 : i32, i32
  }
  func.func @transform_8(%arg0: i32) -> (i32, i32) {
    %c0_i32 = arith.constant 0 : i32
    %c0_i32_0 = arith.constant 0 : i32
    %c0_i32_1 = arith.constant 0 : i32
    return %c0_i32, %c0_i32_0 : i32, i32
  }
  func.func @transform_9(%arg0: i32) -> (i32, i32) {
    %c0_i32 = arith.constant 0 : i32
    %c0_i32_0 = arith.constant 0 : i32
    %c0_i32_1 = arith.constant 0 : i32
    return %c0_i32, %c0_i32_0 : i32, i32
  }
  func.func @transform_10(%arg0: i32) -> (i32, i32) {
    %c0_i32 = arith.constant 0 : i32
    %c0_i32_0 = arith.constant 0 : i32
    %c0_i32_1 = arith.constant 0 : i32
    return %c0_i32, %c0_i32_0 : i32, i32
  }
  func.func @transform_11(%arg0: i32) -> (i32, i32) {
    %c0_i32 = arith.constant 0 : i32
    %c0_i32_0 = arith.constant 0 : i32
    return %arg0, %c0_i32 : i32, i32
  }
}

</mosaic_0001>

<llo_original>
// kernel: tpu_custom_call.1
$region0: #{tpu_custom_call.1}
  #allocation0 [shape = 'u32[]', space=smem, size = 0x4, offset = 0x4, fixed_abs, tag = 'smem constant byte address 0x4 - core index']
  #allocation1 [shape = 'u32[144,128]{1,0:T(1,128)}', space=vmem, size = 0x12000, scoped, tag = 'internal scratch']
  %s0 = inlined_call_operand.hbm [shape: f32[8,32], index: 0, kind: input, shape index: {}]
  %s1 = inlined_call_operand.vmem [shape: s32[8,1], index: 1, kind: input, shape index: {}]
  %s2 = inlined_call_operand.vmem [shape: bf16[32,32], index: 2, kind: input, shape index: {}]
  %s3 = inlined_call_operand.hbm [shape: bf16[8,32], index: 3, kind: input, shape index: {}]
  %s4 = inlined_call_operand.vmem [shape: f32[1,32], index: 4, kind: input, shape index: {}]
  %s5 = inlined_call_operand.hbm [shape: bf16[32,32], index: 5, kind: input, shape index: {}]
  %s6 = inlined_call_operand.vmem [shape: f32[1,32], index: 6, kind: input, shape index: {}]
  %s7 = inlined_call_operand.vmem [shape: f32[1,32], index: 7, kind: input, shape index: {}]
  %s8 = inlined_call_operand.vmem [shape: f32[1,32], index: 8, kind: input, shape index: {}]
  %s9 = inlined_call_operand.vmem [shape: bf16[32,128], index: 9, kind: input, shape index: {}]
  %s10 = inlined_call_operand.vmem [shape: f32[1,128], index: 10, kind: input, shape index: {}]
  %s11 = inlined_call_operand.hbm [shape: f32[8,128], index: 11, kind: output, shape index: {}]
  %s12 = sld [smem:[#allocation0]]
  $region66: #{tpu_custom_call.1} parent=0
    _
  %s14 = ssub.s32 1, %s12
  %s15 = scalar_select 0, %s14, %s12
  $region1: #{tpu_custom_call.1} parent=0
    #allocation2 [shape = 'u8[4096]{0}', space=vmem, size = 0x1000, scoped, tag = 'input window, operand 0, single buffered']
    #allocation3 [shape = 's32[1]{0}', space=sflag, size = 0x4, scoped, tag = 'scoped memory for tpu_custom_call.1']
    #allocation4 [shape = 's32[1]{0}', space=sflag, size = 0x4, scoped, tag = 'scoped memory for tpu_custom_call.1']
    #allocation5 [shape = 'u8[2048]{0}', space=vmem, size = 0x800, scoped, tag = 'input window, operand 3, single buffered']
    #allocation6 [shape = 's32[1]{0}', space=sflag, size = 0x4, scoped, tag = 'scoped memory for tpu_custom_call.1']
    #allocation7 [shape = 'u8[8192]{0}', space=vmem, size = 0x2000, scoped, tag = 'input window, operand 5, single buffered']
    #allocation8 [shape = 'u8[4096]{0}', space=vmem, size = 0x1000, scoped, tag = 'output window, operand 0, single buffered']
    %16 = vsyncpa [#allocation3], 0
    %17 = vsyncpa [#allocation6], 0
    %18 = vsyncpa [#allocation4], 0
    // Predicated region
    $region2: #{tpu_custom_call.1} parent=1 // pred_check
      _
    $region3: #{tpu_custom_call.1} parent=1 // pred_check_branch
      %20 = sbr.rel (0) target = $region5
    $region4: #{tpu_custom_call.1} parent=1 // pred_region
      %s22 = ssub.s32 128, 128
      %23 = vsyncadd [#allocation3], %s22
      %s25 = sshll.u32 [#allocation2], 4
      %s26 = int_to_ptr.vmem [resolvable:$true] %s25
      %28 = dma.hbm_to_vmem [thread:$0]  %s0, 128, %s26, [#allocation3]
    $region5: #{tpu_custom_call.1} parent=1 // pred_fallthru
      _
    // Predicated region
    $region6: #{tpu_custom_call.1} parent=1 // pred_check
      _
    $region7: #{tpu_custom_call.1} parent=1 // pred_check_branch
      %30 = sbr.rel (0) target = $region9
    $region8: #{tpu_custom_call.1} parent=1 // pred_region
      _
    $region9: #{tpu_custom_call.1} parent=1 // pred_fallthru
      _
    // Predicated region
    $region10: #{tpu_custom_call.1} parent=1 // pred_check
      _
    $region11: #{tpu_custom_call.1} parent=1 // pred_check_branch
      %32 = sbr.rel (0) target = $region13
    $region12: #{tpu_custom_call.1} parent=1 // pred_region
      _
    $region13: #{tpu_custom_call.1} parent=1 // pred_fallthru
      _
    // Predicated region
    $region14: #{tpu_custom_call.1} parent=1 // pred_check
      _
    $region15: #{tpu_custom_call.1} parent=1 // pred_check_branch
      %34 = sbr.rel (0) target = $region17
    $region16: #{tpu_custom_call.1} parent=1 // pred_region
      %s36 = ssub.s32 64, 64
      %37 = vsyncadd [#allocation6], %s36
      %s39 = sshll.u32 [#allocation5], 4
      %s40 = int_to_ptr.vmem [resolvable:$true] %s39
      %42 = dma.hbm_to_vmem [thread:$0]  %s3, 64, %s40, [#allocation6]
    $region17: #{tpu_custom_call.1} parent=1 // pred_fallthru
      _
    // Predicated region
    $region18: #{tpu_custom_call.1} parent=1 // pred_check
      _
    $region19: #{tpu_custom_call.1} parent=1 // pred_check_branch
      %44 = sbr.rel (0) target = $region21
    $region20: #{tpu_custom_call.1} parent=1 // pred_region
      _
    $region21: #{tpu_custom_call.1} parent=1 // pred_fallthru
      _
    // Predicated region
    $region22: #{tpu_custom_call.1} parent=1 // pred_check
      _
    $region23: #{tpu_custom_call.1} parent=1 // pred_check_branch
      %46 = sbr.rel (0) target = $region25
    $region24: #{tpu_custom_call.1} parent=1 // pred_region
      %s48 = ssub.s32 256, 256
      %49 = vsyncadd [#allocation6], %s48
      %s50 = sshll.u32 [#allocation7], 4
      %s51 = int_to_ptr.vmem [resolvable:$true] %s50
      %56 = dma.hbm_to_vmem [thread:$0]  %s5, 256, %s51, [#allocation6], 64, 64, 4
    $region25: #{tpu_custom_call.1} parent=1 // pred_fallthru
      _
    // Predicated region
    $region26: #{tpu_custom_call.1} parent=1 // pred_check
      _
    $region27: #{tpu_custom_call.1} parent=1 // pred_check_branch
      %58 = sbr.rel (0) target = $region29
    $region28: #{tpu_custom_call.1} parent=1 // pred_region
      _
    $region29: #{tpu_custom_call.1} parent=1 // pred_fallthru
      _
    // Predicated region
    $region30: #{tpu_custom_call.1} parent=1 // pred_check
      _
    $region31: #{tpu_custom_call.1} parent=1 // pred_check_branch
      %60 = sbr.rel (0) target = $region33
    $region32: #{tpu_custom_call.1} parent=1 // pred_region
      _
    $region33: #{tpu_custom_call.1} parent=1 // pred_fallthru
      _
    // Predicated region
    $region34: #{tpu_custom_call.1} parent=1 // pred_check
      _
    $region35: #{tpu_custom_call.1} parent=1 // pred_check_branch
      %62 = sbr.rel (0) target = $region37
    $region36: #{tpu_custom_call.1} parent=1 // pred_region
      _
    $region37: #{tpu_custom_call.1} parent=1 // pred_fallthru
      _
    // Predicated region
    $region38: #{tpu_custom_call.1} parent=1 // pred_check
      _
    $region39: #{tpu_custom_call.1} parent=1 // pred_check_branch
      %64 = sbr.rel (0) target = $region41
    $region40: #{tpu_custom_call.1} parent=1 // pred_region
      _
    $region41: #{tpu_custom_call.1} parent=1 // pred_fallthru
      _
    // Predicated region
    $region42: #{tpu_custom_call.1} parent=1 // pred_check
      _
    $region43: #{tpu_custom_call.1} parent=1 // pred_check_branch
      %66 = sbr.rel (0) target = $region45
    $region44: #{tpu_custom_call.1} parent=1 // pred_region
      _
    $region45: #{tpu_custom_call.1} parent=1 // pred_fallthru
      _
    // Predicated region
    $region46: #{tpu_custom_call.1} parent=1 // pred_check
      _
    $region47: #{tpu_custom_call.1} parent=1 // pred_check_branch
      %68 = sbr.rel (0) target = $region49
    $region48: #{tpu_custom_call.1} parent=1 // pred_region
      %69 = dma.done [#allocation3], 128
    $region49: #{tpu_custom_call.1} parent=1 // pred_fallthru
      _
    // Predicated region
    $region50: #{tpu_custom_call.1} parent=1 // pred_check
      _
    $region51: #{tpu_custom_call.1} parent=1 // pred_check_branch
      %71 = sbr.rel (0) target = $region53
    $region52: #{tpu_custom_call.1} parent=1 // pred_region
      %72 = dma.done [#allocation6], 64
    $region53: #{tpu_custom_call.1} parent=1 // pred_fallthru
      _
    // Predicated region
    $region54: #{tpu_custom_call.1} parent=1 // pred_check
      _
    $region55: #{tpu_custom_call.1} parent=1 // pred_check_branch
      %74 = sbr.rel (0) target = $region57
    $region56: #{tpu_custom_call.1} parent=1 // pred_region
      %75 = dma.done [#allocation6], 256
    $region57: #{tpu_custom_call.1} parent=1 // pred_fallthru
      _
    %v77 = vld [vmem:[#allocation2] sm:$0xff]
    %v78 = vld [vmem:[%s1] sm:$0xff]
    %v79 = vlaneseq
    %v80 = vand.u32 %v79, 127
    %81 = vset.pattern.permute.xlu0 0
    %82 = vperm.xlu0 %81, %v78
    %v83 = vpop.permute.xlu0 %82
    %vm84 = vcmp.eq.s32.totalorder %v80, %v83
    %v85 = vsel %vm84, 1, 0
    %v86 = vcvt.s32.f32 %v85
    %v87 = vpack.c.bf16 %v86, %v86
    %v88 = vpack.c.bf16 %v77, %v77
    %v89 = vld [vmem:[%s2] sm:$0xf]
    %v90 = vld [vmem:[%s2 + $0x4] sm:$0xf]
    %v91 = vld [vmem:[%s2 + $0x8] sm:$0xf]
    %v92 = vld [vmem:[%s2 + $0xc] sm:$0xf]
    %v93 = vld [vmem:[#allocation5] sm:$0xf]
    %vm94 = vcmask 64512
    %v96 = vsel %vm94, %v87, 0
    %vm98 = vcmask 1043456
    %v100 = vsel %vm98, %v93, 0
    %102 = vmatprep.subr.bf16.mxu0 0
    %103 = vmatpush1.bf16.msra.mxu0 %v100
    %104 = vmatprep.subr.bf16.mxu0 0
    %105 = vmatpush1.bf16.msra.mxu0 0
    %106 = vmatprep.subr.bf16.mxu0 0
    %107 = vmatpush1.bf16.msra.mxu0 0
    %108 = vmatprep.subr.bf16.mxu0 0
    %109 = vmatpush1.bf16.msra.mxu0 0
    %110 = vmatprep.subr.bf16.mxu0 0
    %111 = vmatpush1.bf16.msra.mxu0 0
    %112 = vmatprep.subr.bf16.mxu0 0
    %113 = vmatpush1.bf16.msra.mxu0 0
    %114 = vmatprep.subr.bf16.mxu0 0
    %115 = vmatpush1.bf16.msra.mxu0 0
    %116 = vmatprep.subr.bf16.mxu0 0
    %117 = vmatpush1.bf16.msra.mxu0 0
    %118 = vmatprep.subr.bf16.mxu0 0
    %119 = vmatpush1.bf16.msra.mxu0 0
    %120 = vmatprep.subr.bf16.mxu0 0
    %121 = vmatpush1.bf16.msra.mxu0 0
    %122 = vmatprep.subr.bf16.mxu0 0
    %123 = vmatpush1.bf16.msra.mxu0 0
    %124 = vmatprep.subr.bf16.mxu0 0
    %125 = vmatpush1.bf16.msra.mxu0 0
    %126 = vmatprep.subr.bf16.mxu0 0
    %127 = vmatpush1.bf16.msra.mxu0 0
    %128 = vmatprep.subr.bf16.mxu0 0
    %129 = vmatpush1.bf16.msra.mxu0 0
    %130 = vmatprep.subr.bf16.mxu0 0
    %131 = vmatpush1.bf16.msra.mxu0 0
    %132 = vmatprep.subr.bf16.mxu0 0
    %133 = vmatpush1.bf16.msra.mxu0 0
    %134 = vmatprep.mubr.bf16.mxu0 0
    %135 = vmatmul.mubr.bf16.gmra.mrb[0].mxu0 %v96
    %v136 = vpop.f32.mrb[0].mxu0
    %v137 = vadd.f32 0.0, %v136
    %v138 = vpop.f32.mrb[0].mxu0
    %v139 = vpop.f32.mrb[0].mxu0
    %v140 = vpop.f32.mrb[0].mxu0
    %141 = vdwg.mxu0
    %v146 = vunpack.c.l.b16 %v89
    %v147 = vunpack.c.l.b16 %v90
    %v148 = vunpack.c.l.b16 %v91
    %v149 = vunpack.c.l.b16 %v92
    %v150 = vpack.c.b16 %v147, %v146
    %v151 = vpack.c.b16 %v149, %v148
    %vm154 = vcmask 261120
    %v156 = vsel %vm154, %v88, 0
    %158 = vmatprep.subr.bf16.mxu0 0
    %159 = vmatpush1.bf16.msra.mxu0 %v150
    %160 = vmatprep.subr.bf16.mxu0 0
    %161 = vmatpush1.bf16.msra.mxu0 %v151
    %162 = vmatprep.subr.bf16.mxu0 0
    %163 = vmatpush1.bf16.msra.mxu0 0
    %164 = vmatprep.subr.bf16.mxu0 0
    %165 = vmatpush1.bf16.msra.mxu0 0
    %166 = vmatprep.subr.bf16.mxu0 0
    %167 = vmatpush1.bf16.msra.mxu0 0
    %168 = vmatprep.subr.bf16.mxu0 0
    %169 = vmatpush1.bf16.msra.mxu0 0
    %170 = vmatprep.subr.bf16.mxu0 0
    %171 = vmatpush1.bf16.msra.mxu0 0
    %172 = vmatprep.subr.bf16.mxu0 0
    %173 = vmatpush1.bf16.msra.mxu0 0
    %174 = vmatprep.subr.bf16.mxu0 0
    %175 = vmatpush1.bf16.msra.mxu0 0
    %176 = vmatprep.subr.bf16.mxu0 0
    %177 = vmatpush1.bf16.msra.mxu0 0
    %178 = vmatprep.subr.bf16.mxu0 0
    %179 = vmatpush1.bf16.msra.mxu0 0
    %180 = vmatprep.subr.bf16.mxu0 0
    %181 = vmatpush1.bf16.msra.mxu0 0
    %182 = vmatprep.subr.bf16.mxu0 0
    %183 = vmatpush1.bf16.msra.mxu0 0
    %184 = vmatprep.subr.bf16.mxu0 0
    %185 = vmatpush1.bf16.msra.mxu0 0
    %186 = vmatprep.subr.bf16.mxu0 0
    %187 = vmatpush1.bf16.msra.mxu0 0
    %188 = vmatprep.subr.bf16.mxu0 0
    %189 = vmatpush1.bf16.msra.mxu0 0
    %190 = vmatprep.mubr.bf16.mxu0 0
    %191 = vmatmul.mubr.bf16.gmra.mrb[0].mxu0 %v156
    %v192 = vpop.f32.mrb[0].mxu0
    %v193 = vadd.f32 %v137, %v192
    %v194 = vpop.f32.mrb[0].mxu0
    %v195 = vpop.f32.mrb[0].mxu0
    %v196 = vpop.f32.mrb[0].mxu0
    %197 = vdwg.mxu0
    %v198 = vld [vmem:[%s4] sm:$0x1]
    %v200 = vlaneseq
    %v201 = vshrl.u32 %v200, 7
    %v202 = vsub.s32 0, %v201
    %v203 = vrot.slane %v198, %v202
    %v205 = vadd.f32 %v193, %v203
    %v206 = vmax.f32 %v205, 0.0
    %v207 = vpack.c.bf16 %v206, %v206
    %v208 = vld [vmem:[#allocation7] sm:$0xf]
    %v209 = vld [vmem:[#allocation7 + $0x4] sm:$0xf]
    %v210 = vld [vmem:[#allocation7 + $0x8] sm:$0xf]
    %v211 = vld [vmem:[#allocation7 + $0xc] sm:$0xf]
    %v212 = vld [vmem:[%s6] sm:$0x1]
    %v214 = vlaneseq
    %v215 = vshrl.u32 %v214, 7
    %v216 = vsub.s32 0, %v215
    %v217 = vrot.slane %v212, %v216
    %v223 = vunpack.c.l.b16 %v208
    %v224 = vunpack.c.l.b16 %v209
    %v225 = vunpack.c.l.b16 %v210
    %v226 = vunpack.c.l.b16 %v211
    %v227 = vpack.c.b16 %v224, %v223
    %v228 = vpack.c.b16 %v226, %v225
    %v232 = vsel %vm154, %v207, 0
    %234 = vmatprep.subr.bf16.mxu0 0
    %235 = vmatpush1.bf16.msra.mxu0 %v227
    %236 = vmatprep.subr.bf16.mxu0 0
    %237 = vmatpush1.bf16.msra.mxu0 %v228
    %238 = vmatprep.subr.bf16.mxu0 0
    %239 = vmatpush1.bf16.msra.mxu0 0
    %240 = vmatprep.subr.bf16.mxu0 0
    %241 = vmatpush1.bf16.msra.mxu0 0
    %242 = vmatprep.subr.bf16.mxu0 0
    %243 = vmatpush1.bf16.msra.mxu0 0
    %244 = vmatprep.subr.bf16.mxu0 0
    %245 = vmatpush1.bf16.msra.mxu0 0
    %246 = vmatprep.subr.bf16.mxu0 0
    %247 = vmatpush1.bf16.msra.mxu0 0
    %248 = vmatprep.subr.bf16.mxu0 0
    %249 = vmatpush1.bf16.msra.mxu0 0
    %250 = vmatprep.subr.bf16.mxu0 0
    %251 = vmatpush1.bf16.msra.mxu0 0
    %252 = vmatprep.subr.bf16.mxu0 0
    %253 = vmatpush1.bf16.msra.mxu0 0
    %254 = vmatprep.subr.bf16.mxu0 0
    %255 = vmatpush1.bf16.msra.mxu0 0
    %256 = vmatprep.subr.bf16.mxu0 0
    %257 = vmatpush1.bf16.msra.mxu0 0
    %258 = vmatprep.subr.bf16.mxu0 0
    %259 = vmatpush1.bf16.msra.mxu0 0
    %260 = vmatprep.subr.bf16.mxu0 0
    %261 = vmatpush1.bf16.msra.mxu0 0
    %262 = vmatprep.subr.bf16.mxu0 0
    %263 = vmatpush1.bf16.msra.mxu0 0
    %264 = vmatprep.subr.bf16.mxu0 0
    %265 = vmatpush1.bf16.msra.mxu0 0
    %266 = vmatprep.mubr.bf16.mxu0 0
    %267 = vmatmul.mubr.bf16.gmra.mrb[0].mxu0 %v232
    %v268 = vpop.f32.mrb[0].mxu0
    %v269 = vadd.f32 %v217, %v268
    %v270 = vpop.f32.mrb[0].mxu0
    %v271 = vpop.f32.mrb[0].mxu0
    %v272 = vpop.f32.mrb[0].mxu0
    %273 = vdwg.mxu0
    %v274 = vsel %vm154, %v269, 0.0
    %275 = vadd.xlane.f32.xlu0 %v274
    %v276 = vpop.xlane.xlu0 %275
    %v277 = vrcp.pop 32.0
    %v278 = vmul.f32 %v276, %v277
    %v279 = vsub.f32 %v269, %v278
    %v280 = vmul.f32 %v279, %v279
    %v281 = vsel %vm154, %v280, 0.0
    %282 = vadd.xlane.f32.xlu0 %v281
    %v283 = vpop.xlane.xlu0 %282
    %v284 = vmul.f32 %v283, %v277
    %v285 = vadd.f32 %v284, 1e-05
    %v286 = vrsqrt.pop %v285
    %v287 = vmul.f32 %v279, %v286
    %v288 = vld [vmem:[%s7] sm:$0x1]
    %v290 = vlaneseq
    %v291 = vshrl.u32 %v290, 7
    %v292 = vsub.s32 0, %v291
    %v293 = vrot.slane %v288, %v292
    %v295 = vmul.f32 %v287, %v293
    %v296 = vld [vmem:[%s8] sm:$0x1]
    %v298 = vlaneseq
    %v299 = vshrl.u32 %v298, 7
    %v300 = vsub.s32 0, %v299
    %v301 = vrot.slane %v296, %v300
    %v303 = vadd.f32 %v295, %v301
    %v304 = vmax.f32 %v303, 0.0
    %v305 = vpack.c.bf16 %v304, %v304
    %v306 = vld [vmem:[%s9] sm:$0xf]
    %v307 = vld [vmem:[%s9 + $0x4] sm:$0xf]
    %v308 = vld [vmem:[%s9 + $0x8] sm:$0xf]
    %v309 = vld [vmem:[%s9 + $0xc] sm:$0xf]
    %v310 = vld [vmem:[%s10] sm:$0x1]
    %v312 = vlaneseq
    %v313 = vshrl.u32 %v312, 7
    %v314 = vsub.s32 0, %v313
    %v315 = vrot.slane %v310, %v314
    %v321 = vunpack.c.l.b16 %v306
    %v322 = vunpack.c.l.b16 %v307
    %v323 = vunpack.c.l.b16 %v308
    %v324 = vunpack.c.l.b16 %v309
    %v325 = vpack.c.b16 %v322, %v321
    %v326 = vpack.c.b16 %v324, %v323
    %v330 = vsel %vm154, %v305, 0
    %332 = vmatprep.subr.bf16.mxu0 0
    %333 = vmatpush1.bf16.msra.mxu0 %v325
    %334 = vmatprep.subr.bf16.mxu0 0
    %335 = vmatpush1.bf16.msra.mxu0 %v326
    %336 = vmatprep.subr.bf16.mxu0 0
    %337 = vmatpush1.bf16.msra.mxu0 0
    %338 = vmatprep.subr.bf16.mxu0 0
    %339 = vmatpush1.bf16.msra.mxu0 0
    %340 = vmatprep.subr.bf16.mxu0 0
    %341 = vmatpush1.bf16.msra.mxu0 0
    %342 = vmatprep.subr.bf16.mxu0 0
    %343 = vmatpush1.bf16.msra.mxu0 0
    %344 = vmatprep.subr.bf16.mxu0 0
    %345 = vmatpush1.bf16.msra.mxu0 0
    %346 = vmatprep.subr.bf16.mxu0 0
    %347 = vmatpush1.bf16.msra.mxu0 0
    %348 = vmatprep.subr.bf16.mxu0 0
    %349 = vmatpush1.bf16.msra.mxu0 0
    %350 = vmatprep.subr.bf16.mxu0 0
    %351 = vmatpush1.bf16.msra.mxu0 0
    %352 = vmatprep.subr.bf16.mxu0 0
    %353 = vmatpush1.bf16.msra.mxu0 0
    %354 = vmatprep.subr.bf16.mxu0 0
    %355 = vmatpush1.bf16.msra.mxu0 0
    %356 = vmatprep.subr.bf16.mxu0 0
    %357 = vmatpush1.bf16.msra.mxu0 0
    %358 = vmatprep.subr.bf16.mxu0 0
    %359 = vmatpush1.bf16.msra.mxu0 0
    %360 = vmatprep.subr.bf16.mxu0 0
    %361 = vmatpush1.bf16.msra.mxu0 0
    %362 = vmatprep.subr.bf16.mxu0 0
    %363 = vmatpush1.bf16.msra.mxu0 0
    %364 = vmatprep.mubr.bf16.mxu0 0
    %365 = vmatmul.mubr.bf16.gmra.mrb[0].mxu0 %v330
    %v366 = vpop.f32.mrb[0].mxu0
    %v367 = vadd.f32 %v315, %v366
    %v368 = vpop.f32.mrb[0].mxu0
    %v369 = vpop.f32.mrb[0].mxu0
    %v370 = vpop.f32.mrb[0].mxu0
    %371 = vdwg.mxu0
    %372 = vst [vmem:[#allocation8] sm:$0xff] %v367
    // Predicated region
    $region58: #{tpu_custom_call.1} parent=1 // pred_check
      _
    $region59: #{tpu_custom_call.1} parent=1 // pred_check_branch
      %374 = sbr.rel (0) target = $region61
    $region60: #{tpu_custom_call.1} parent=1 // pred_region
      %s376 = ssub.s32 128, 128
      %377 = vsyncadd [#allocation4], %s376
      %s379 = sshll.u32 [#allocation8], 4
      %s380 = int_to_ptr.vmem [resolvable:$true] %s379
      %382 = dma.vmem_to_hbm [thread:$0]  %s380, 128, %s11, [#allocation4]
    $region61: #{tpu_custom_call.1} parent=1 // pred_fallthru
      _
    // Predicated region
    $region62: #{tpu_custom_call.1} parent=1 // pred_check
      _
    $region63: #{tpu_custom_call.1} parent=1 // pred_check_branch
      %384 = sbr.rel (0) target = $region65
    $region64: #{tpu_custom_call.1} parent=1 // pred_region
      %385 = dma.done [#allocation4], 128
    $region65: #{tpu_custom_call.1} parent=1 // pred_fallthru
      _
    %386 = vsyncpa [#allocation3], 1
    %387 = vsyncpa [#allocation6], 1
    %388 = vsyncpa [#allocation4], 1

</llo_original>
